<compile_context>
chip_gen: v5e
topology: v5e:2x2
jax: 0.10.0
libtpu: 0.0.40
codegen_flags: <defaults>
</compile_context>

<pallas_src>
import functools

import jax
import jax.numpy as jnp
from jax import lax
from jax.experimental import pallas as pl
from jax.experimental.pallas import tpu as pltpu


# ----------------------------------------------------------------------------
# Fused kernel: one batch element per grid step, everything stays in VMEM.
# ----------------------------------------------------------------------------
def _fused_kernel(x_ref, wqkv_ref, bqkv_ref,
                  wo1_ref, bo1_ref, w2_ref, b2_ref, w3_ref, b3_ref,
                  w4_ref, b4_ref, o_ref, *, embed):
    E = embed
    x = x_ref[0]                                                     # (S, E)

    # ---- attention -------------------------------------------------------
    # Fused QKV projection: one MXU push with N = 3E (1/sqrt(E) is already
    # folded into the Wq / bq columns of wqkv / bqkv).
    qkv = (jnp.dot(x, wqkv_ref[...], preferred_element_type=jnp.float32)
           + bqkv_ref[...])                                          # (S, 3E)
    q = qkv[:, :E]
    k = qkv[:, E:2 * E]
    v = qkv[:, 2 * E:]

    # scores = q @ k^T, contracting the last dims directly (no k.T transpose).
    s = lax.dot_general(q, k, (((1,), (1,)), ((), ())),
                        preferred_element_type=jnp.float32)          # (S, S)
    s = s - jnp.max(s, axis=-1, keepdims=True)
    p = jnp.exp(s)
    p = p * pl.reciprocal(jnp.sum(p, axis=-1, keepdims=True), approx=True)

    a = jnp.dot(p, v, preferred_element_type=jnp.float32)            # (S, E)

    # ---- (attention out-proj fused with layer1) + MLP --------------------
    # wo1 = Wo @ W1, bo1 = bo @ W1 + b1  (precomputed in the wrapper).
    h = jnp.maximum(
        jnp.dot(a, wo1_ref[...], preferred_element_type=jnp.float32) + bo1_ref[...], 0.0)
    h = jnp.maximum(
        jnp.dot(h, w2_ref[...], preferred_element_type=jnp.float32) + b2_ref[...], 0.0)
    h = jnp.maximum(
        jnp.dot(h, w3_ref[...], preferred_element_type=jnp.float32) + b3_ref[...], 0.0)
    out = jnp.dot(h, w4_ref[...], preferred_element_type=jnp.float32) + b4_ref[...]

    o_ref[0] = out.astype(o_ref.dtype)                               # (S, O)


# ----------------------------------------------------------------------------
# Wrapper: fold attention scale into Wq/bq, fuse QKV weights, fold the
# attention output projection into layer1, one pallas_call.
# ----------------------------------------------------------------------------
def my_model_forward(x, params):
    B, S, E = x.shape
    O = params["w4"].shape[1]
    scale = 1.0 / (E ** 0.5)

    # Tiny constant-weight preprocessing (constant-folded under jit):
    #   * 1/sqrt(E) folded into the Q columns,
    #   * Wq/Wk/Wv concatenated into one (E, 3E) QKV weight,
    #   * Wo @ W1 fused (no nonlinearity between them in the model).
    wqkv = jnp.concatenate(
        [params["wq"] * scale, params["wk"], params["wv"]], axis=1)   # (E, 3E)
    bqkv = jnp.concatenate(
        [params["bq"] * scale, params["bk"], params["bv"]], axis=1)   # (1, 3E)
    wo1 = params["wo"] @ params["w1"]                                 # (E, H1)
    bo1 = params["bo"] @ params["w1"] + params["b1"]                  # (1, H1)

    full = lambda arr: pl.BlockSpec(arr.shape, lambda b: (0, 0))

    return pl.pallas_call(
        functools.partial(_fused_kernel, embed=E),
        out_shape=jax.ShapeDtypeStruct((B, S, O), x.dtype),
        grid_spec=pltpu.PrefetchScalarGridSpec(
            num_scalar_prefetch=0,
            grid=(B,),
            in_specs=[
                pl.BlockSpec((1, S, E), lambda b: (b, 0, 0)),
                full(wqkv), full(bqkv),
                full(wo1), full(bo1),
                full(params["w2"]), full(params["b2"]),
                full(params["w3"]), full(params["b3"]),
                full(params["w4"]), full(params["b4"]),
            ],
            out_specs=pl.BlockSpec((1, S, O), lambda b: (b, 0, 0)),
        ),
        compiler_params=pltpu.CompilerParams(
            dimension_semantics=("parallel",)),   # lets megacore split batches
    )(x, wqkv, bqkv, wo1, bo1,
      params["w2"], params["b2"],
      params["w3"], params["b3"],
      params["w4"], params["b4"])


# ----------------------------------------------------------------------------
# Pure-JAX reference for numerical verification (uses the un-fused params).
# ----------------------------------------------------------------------------
def my_model_reference(x, p):
    E = x.shape[-1]
    q = x @ p["wq"] + p["bq"][0]
    k = x @ p["wk"] + p["bk"][0]
    v = x @ p["wv"] + p["bv"][0]
    s = jnp.einsum("bqd,bkd->bqk", q, k) / (E ** 0.5)
    a = jax.nn.softmax(s, axis=-1) @ v
    a = a @ p["wo"] + p["bo"][0]
    h = jax.nn.relu(a @ p["w1"] + p["b1"][0])
    h = jax.nn.relu(h @ p["w2"] + p["b2"][0])
    h = jax.nn.relu(h @ p["w3"] + p["b3"][0])
    return h @ p["w4"] + p["b4"][0]


def init_params(key, E, H1, H2, H3, O):
    ks = jax.random.split(key, 16)

    def lin(k, fan_in, shape):
        return jax.random.normal(k, shape, jnp.float32) / jnp.sqrt(fan_in)

    return {
        "wq": lin(ks[0], E, (E, E)),   "bq": lin(ks[1], E, (1, E)),
        "wk": lin(ks[2], E, (E, E)),   "bk": lin(ks[3], E, (1, E)),
        "wv": lin(ks[4], E, (E, E)),   "bv": lin(ks[5], E, (1, E)),
        "wo": lin(ks[6], E, (E, E)),   "bo": lin(ks[7], E, (1, E)),
        "w1": lin(ks[8], E, (E, H1)),    "b1": lin(ks[9],  E,  (1, H1)),
        "w2": lin(ks[10], H1, (H1, H2)), "b2": lin(ks[11], H1, (1, H2)),
        "w3": lin(ks[12], H2, (H2, H3)), "b3": lin(ks[13], H2, (1, H3)),
        "w4": lin(ks[14], H3, (H3, O)),  "b4": lin(ks[15], H3, (1, O)),
    }


if __name__ == "__main__":
    # Small shapes consistent with the module (input_size -> h1 -> h2 -> h3 -> 1)
    B, S = 2, 8
    E, H1, H2, H3, O = 32, 64, 32, 16, 1

    key = jax.random.PRNGKey(0)
    kx, kp = jax.random.split(key)
    x = jax.random.normal(kx, (B, S, E), jnp.float32)
    params = init_params(kp, E, H1, H2, H3, O)

    fwd = jax.jit(my_model_forward)
    out = jax.block_until_ready(fwd(x, params))

    ref = my_model_reference(x, params)
    assert out.shape == (B, S, O), out.shape
    # slightly loosened tolerance: approx EUP reciprocal + Wo@W1 weight fold
    max_err = float(jnp.max(jnp.abs(out - ref)))
    assert jnp.allclose(out, ref, atol=2e-3, rtol=2e-3), max_err

    print("KERNEL_OK")
</pallas_src>

<mosaic_0001>
module attributes {stable_mosaic.version = 11 : i64} {
  func.func @_fused_kernel(%arg0: i32, %arg1: memref<1x8x32xf32, #tpu.memory_space<vmem>>, %arg2: memref<32x96xf32, #tpu.memory_space<vmem>>, %arg3: memref<1x96xf32, #tpu.memory_space<vmem>>, %arg4: memref<32x64xf32, #tpu.memory_space<vmem>>, %arg5: memref<1x64xf32, #tpu.memory_space<vmem>>, %arg6: memref<64x32xf32, #tpu.memory_space<vmem>>, %arg7: memref<1x32xf32, #tpu.memory_space<vmem>>, %arg8: memref<32x16xf32, #tpu.memory_space<vmem>>, %arg9: memref<1x16xf32, #tpu.memory_space<vmem>>, %arg10: memref<16x1xf32, #tpu.memory_space<vmem>>, %arg11: memref<1x1xf32, #tpu.memory_space<vmem>>, %arg12: memref<1x8x1xf32, #tpu.memory_space<vmem>>) attributes {dimension_semantics = [#tpu.dimension_semantics<parallel>], iteration_bounds = array<i64: 2>, scalar_prefetch = 0 : i64, scratch_operands = 0 : i64, tpu.core_type = #tpu.core_type<tc>, window_params = [{transform_indices = @transform_0, window_bounds = array<i64: 1, 8, 32>}, {pipeline_mode = #tpu.pipeline_mode<synchronous>, transform_indices = @transform_1, window_bounds = array<i64: 32, 96>}, {pipeline_mode = #tpu.pipeline_mode<synchronous>, transform_indices = @transform_2, window_bounds = array<i64: 1, 96>}, {pipeline_mode = #tpu.pipeline_mode<synchronous>, transform_indices = @transform_3, window_bounds = array<i64: 32, 64>}, {pipeline_mode = #tpu.pipeline_mode<synchronous>, transform_indices = @transform_4, window_bounds = array<i64: 1, 64>}, {pipeline_mode = #tpu.pipeline_mode<synchronous>, transform_indices = @transform_5, window_bounds = array<i64: 64, 32>}, {pipeline_mode = #tpu.pipeline_mode<synchronous>, transform_indices = @transform_6, window_bounds = array<i64: 1, 32>}, {pipeline_mode = #tpu.pipeline_mode<synchronous>, transform_indices = @transform_7, window_bounds = array<i64: 32, 16>}, {pipeline_mode = #tpu.pipeline_mode<synchronous>, transform_indices = @transform_8, window_bounds = array<i64: 1, 16>}, {pipeline_mode = #tpu.pipeline_mode<synchronous>, transform_indices = @transform_9, window_bounds = array<i64: 16, 1>}, {pipeline_mode = #tpu.pipeline_mode<synchronous>, transform_indices = @transform_10, window_bounds = array<i64: 1, 1>}, {transform_indices = @transform_11, window_bounds = array<i64: 1, 8, 1>}]} {
    %c0 = arith.constant 0 : index
    %c0_0 = arith.constant 0 : index
    %c0_1 = arith.constant 0 : index
    %0 = vector.load %arg1[%c0, %c0_0, %c0_1] : memref<1x8x32xf32, #tpu.memory_space<vmem>>, vector<1x8x32xf32>
    %1 = vector.shape_cast %0 : vector<1x8x32xf32> to vector<8x32xf32>
    %c0_2 = arith.constant 0 : index
    %c0_3 = arith.constant 0 : index
    %2 = vector.load %arg2[%c0_2, %c0_3] : memref<32x96xf32, #tpu.memory_space<vmem>>, vector<32x96xf32>
    %cst = arith.constant dense<0.000000e+00> : vector<8x96xf32>
    %3 = tpu.matmul %1, %2, %cst {dimension_numbers = #tpu.dot_dimension_numbers<[1], [0], [0], [1], [0, 0, 1, 1], [], []>} : vector<8x32xf32>, vector<32x96xf32>, vector<8x96xf32> -> vector<8x96xf32>
    %c0_4 = arith.constant 0 : index
    %c0_5 = arith.constant 0 : index
    %4 = vector.load %arg3[%c0_4, %c0_5] : memref<1x96xf32, #tpu.memory_space<vmem>>, vector<1x96xf32>
    %5 = vector.broadcast %4 : vector<1x96xf32> to vector<8x96xf32>
    %6 = arith.addf %3, %5 : vector<8x96xf32>
    %7 = vector.extract_strided_slice %6 {offsets = [0, 0], sizes = [8, 32], strides = [1, 1]} : vector<8x96xf32> to vector<8x32xf32>
    %8 = vector.extract_strided_slice %6 {offsets = [0, 32], sizes = [8, 32], strides = [1, 1]} : vector<8x96xf32> to vector<8x32xf32>
    %9 = vector.extract_strided_slice %6 {offsets = [0, 64], sizes = [8, 32], strides = [1, 1]} : vector<8x96xf32> to vector<8x32xf32>
    %cst_6 = arith.constant dense<0.000000e+00> : vector<8x8xf32>
    %10 = tpu.matmul %7, %8, %cst_6 {dimension_numbers = #tpu.dot_dimension_numbers<[1], [1], [0], [0], [0, 0, 1, 0], [], []>} : vector<8x32xf32>, vector<8x32xf32>, vector<8x8xf32> -> vector<8x8xf32>
    %cst_7 = arith.constant dense<0xFF800000> : vector<8xf32>
    %11 = vector.multi_reduction <maximumf>, %10, %cst_7 [1] : vector<8x8xf32> to vector<8xf32>
    %12 = vector.shape_cast %11 : vector<8xf32> to vector<8x1xf32>
    %13 = vector.broadcast %12 : vector<8x1xf32> to vector<8x8xf32>
    %14 = arith.subf %10, %13 : vector<8x8xf32>
    %15 = math.exp %14 : vector<8x8xf32>
    %cst_8 = arith.constant dense<0.000000e+00> : vector<8xf32>
    %16 = vector.multi_reduction <add>, %15, %cst_8 [1] : vector<8x8xf32> to vector<8xf32>
    %17 = vector.shape_cast %16 : vector<8xf32> to vector<8x1xf32>
    %18 = tpu.reciprocal %17 {approx = true} : vector<8x1xf32> -> vector<8x1xf32>
    %19 = vector.broadcast %18 : vector<8x1xf32> to vector<8x8xf32>
    %20 = arith.mulf %15, %19 : vector<8x8xf32>
    %cst_9 = arith.constant dense<0.000000e+00> : vector<8x32xf32>
    %21 = tpu.matmul %20, %9, %cst_9 {dimension_numbers = #tpu.dot_dimension_numbers<[1], [0], [0], [1], [0, 0, 1, 1], [], []>} : vector<8x8xf32>, vector<8x32xf32>, vector<8x32xf32> -> vector<8x32xf32>
    %c0_10 = arith.constant 0 : index
    %c0_11 = arith.constant 0 : index
    %22 = vector.load %arg4[%c0_10, %c0_11] : memref<32x64xf32, #tpu.memory_space<vmem>>, vector<32x64xf32>
    %cst_12 = arith.constant dense<0.000000e+00> : vector<8x64xf32>
    %23 = tpu.matmul %21, %22, %cst_12 {dimension_numbers = #tpu.dot_dimension_numbers<[1], [0], [0], [1], [0, 0, 1, 1], [], []>} : vector<8x32xf32>, vector<32x64xf32>, vector<8x64xf32> -> vector<8x64xf32>
    %c0_13 = arith.constant 0 : index
    %c0_14 = arith.constant 0 : index
    %24 = vector.load %arg5[%c0_13, %c0_14] : memref<1x64xf32, #tpu.memory_space<vmem>>, vector<1x64xf32>
    %25 = vector.broadcast %24 : vector<1x64xf32> to vector<8x64xf32>
    %26 = arith.addf %23, %25 : vector<8x64xf32>
    %cst_15 = arith.constant 0.000000e+00 : f32
    %27 = vector.broadcast %cst_15 : f32 to vector<8x64xf32>
    %28 = arith.maximumf %26, %27 : vector<8x64xf32>
    %c0_16 = arith.constant 0 : index
    %c0_17 = arith.constant 0 : index
    %29 = vector.load %arg6[%c0_16, %c0_17] : memref<64x32xf32, #tpu.memory_space<vmem>>, vector<64x32xf32>
    %cst_18 = arith.constant dense<0.000000e+00> : vector<8x32xf32>
    %30 = tpu.matmul %28, %29, %cst_18 {dimension_numbers = #tpu.dot_dimension_numbers<[1], [0], [0], [1], [0, 0, 1, 1], [], []>} : vector<8x64xf32>, vector<64x32xf32>, vector<8x32xf32> -> vector<8x32xf32>
    %c0_19 = arith.constant 0 : index
    %c0_20 = arith.constant 0 : index
    %31 = vector.load %arg7[%c0_19, %c0_20] : memref<1x32xf32, #tpu.memory_space<vmem>>, vector<1x32xf32>
    %32 = vector.broadcast %31 : vector<1x32xf32> to vector<8x32xf32>
    %33 = arith.addf %30, %32 : vector<8x32xf32>
    %cst_21 = arith.constant 0.000000e+00 : f32
    %34 = vector.broadcast %cst_21 : f32 to vector<8x32xf32>
    %35 = arith.maximumf %33, %34 : vector<8x32xf32>
    %c0_22 = arith.constant 0 : index
    %c0_23 = arith.constant 0 : index
    %36 = vector.load %arg8[%c0_22, %c0_23] : memref<32x16xf32, #tpu.memory_space<vmem>>, vector<32x16xf32>
    %cst_24 = arith.constant dense<0.000000e+00> : vector<8x16xf32>
    %37 = tpu.matmul %35, %36, %cst_24 {dimension_numbers = #tpu.dot_dimension_numbers<[1], [0], [0], [1], [0, 0, 1, 1], [], []>} : vector<8x32xf32>, vector<32x16xf32>, vector<8x16xf32> -> vector<8x16xf32>
    %c0_25 = arith.constant 0 : index
    %c0_26 = arith.constant 0 : index
    %38 = vector.load %arg9[%c0_25, %c0_26] : memref<1x16xf32, #tpu.memory_space<vmem>>, vector<1x16xf32>
    %39 = vector.broadcast %38 : vector<1x16xf32> to vector<8x16xf32>
    %40 = arith.addf %37, %39 : vector<8x16xf32>
    %cst_27 = arith.constant 0.000000e+00 : f32
    %41 = vector.broadcast %cst_27 : f32 to vector<8x16xf32>
    %42 = arith.maximumf %40, %41 : vector<8x16xf32>
    %c0_28 = arith.constant 0 : index
    %c0_29 = arith.constant 0 : index
    %43 = vector.load %arg10[%c0_28, %c0_29] : memref<16x1xf32, #tpu.memory_space<vmem>>, vector<16x1xf32>
    %cst_30 = arith.constant dense<0.000000e+00> : vector<8x1xf32>
    %44 = tpu.matmul %42, %43, %cst_30 {dimension_numbers = #tpu.dot_dimension_numbers<[1], [0], [0], [1], [0, 0, 1, 1], [], []>} : vector<8x16xf32>, vector<16x1xf32>, vector<8x1xf32> -> vector<8x1xf32>
    %c0_31 = arith.constant 0 : index
    %c0_32 = arith.constant 0 : index
    %45 = vector.load %arg11[%c0_31, %c0_32] : memref<1x1xf32, #tpu.memory_space<vmem>>, vector<1x1xf32>
    %46 = vector.broadcast %45 : vector<1x1xf32> to vector<8x1xf32>
    %47 = arith.addf %44, %46 : vector<8x1xf32>
    %c0_33 = arith.constant 0 : index
    %c0_34 = arith.constant 0 : index
    %c0_35 = arith.constant 0 : index
    %48 = vector.load %arg12[%c0_33, %c0_34, %c0_35] : memref<1x8x1xf32, #tpu.memory_space<vmem>>, vector<1x8x1xf32>
    %49 = vector.shape_cast %48 : vector<1x8x1xf32> to vector<8x1xf32>
    %50 = vector.shape_cast %47 : vector<8x1xf32> to vector<1x8x1xf32>
    tpu.vector_store %arg12[%c0_33, %c0_34, %c0_35], %50 {strides = array<i32>} : memref<1x8x1xf32, #tpu.memory_space<vmem>>, vector<1x8x1xf32>,
    return
  }
  func.func @transform_0(%arg0: i32) -> (i32, i32, i32) {
    %c0_i32 = arith.constant 0 : i32
    %c0_i32_0 = arith.constant 0 : i32
    %c0_i32_1 = arith.constant 0 : i32
    return %arg0, %c0_i32, %c0_i32_0 : i32, i32, i32
  }
  func.func @transform_1(%arg0: i32) -> (i32, i32) {
    %c0_i32 = arith.constant 0 : i32
    %c0_i32_0 = arith.constant 0 : i32
    %c0_i32_1 = arith.constant 0 : i32
    return %c0_i32, %c0_i32_0 : i32, i32
  }
  func.func @transform_2(%arg0: i32) -> (i32, i32) {
    %c0_i32 = arith.constant 0 : i32
    %c0_i32_0 = arith.constant 0 : i32
    %c0_i32_1 = arith.constant 0 : i32
    return %c0_i32, %c0_i32_0 : i32, i32
  }
  func.func @transform_3(%arg0: i32) -> (i32, i32) {
    %c0_i32 = arith.constant 0 : i32
    %c0_i32_0 = arith.constant 0 : i32
    %c0_i32_1 = arith.constant 0 : i32
    return %c0_i32, %c0_i32_0 : i32, i32
  }
  func.func @transform_4(%arg0: i32) -> (i32, i32) {
    %c0_i32 = arith.constant 0 : i32
    %c0_i32_0 = arith.constant 0 : i32
    %c0_i32_1 = arith.constant 0 : i32
    return %c0_i32, %c0_i32_0 : i32, i32
  }
  func.func @transform_5(%arg0: i32) -> (i32, i32) {
    %c0_i32 = arith.constant 0 : i32
    %c0_i32_0 = arith.constant 0 : i32
    %c0_i32_1 = arith.constant 0 : i32
    return %c0_i32, %c0_i32_0 : i32, i32
  }
  func.func @transform_6(%arg0: i32) -> (i32, i32) {
    %c0_i32 = arith.constant 0 : i32
    %c0_i32_0 = arith.constant 0 : i32
    %c0_i32_1 = arith.constant 0 : i32
    return %c0_i32, %c0_i32_0 : i32, i32
  }
  func.func @transform_7(%arg0: i32) -> (i32, i32) {
    %c0_i32 = arith.constant 0 : i32
    %c0_i32_0 = arith.constant 0 : i32
    %c0_i32_1 = arith.constant 0 : i32
    return %c0_i32, %c0_i32_0 : i32, i32
  }
  func.func @transform_8(%arg0: i32) -> (i32, i32) {
    %c0_i32 = arith.constant 0 : i32
    %c0_i32_0 = arith.constant 0 : i32
    %c0_i32_1 = arith.constant 0 : i32
    return %c0_i32, %c0_i32_0 : i32, i32
  }
  func.func @transform_9(%arg0: i32) -> (i32, i32) {
    %c0_i32 = arith.constant 0 : i32
    %c0_i32_0 = arith.constant 0 : i32
    %c0_i32_1 = arith.constant 0 : i32
    return %c0_i32, %c0_i32_0 : i32, i32
  }
  func.func @transform_10(%arg0: i32) -> (i32, i32) {
    %c0_i32 = arith.constant 0 : i32
    %c0_i32_0 = arith.constant 0 : i32
    %c0_i32_1 = arith.constant 0 : i32
    return %c0_i32, %c0_i32_0 : i32, i32
  }
  func.func @transform_11(%arg0: i32) -> (i32, i32, i32) {
    %c0_i32 = arith.constant 0 : i32
    %c0_i32_0 = arith.constant 0 : i32
    %c0_i32_1 = arith.constant 0 : i32
    return %arg0, %c0_i32, %c0_i32_0 : i32, i32, i32
  }
}

</mosaic_0001>

<llo_original>
// kernel: my_model_forward.1
$region0: #{my_model_forward.1}
  #allocation0 [shape = 'u32[]', space=smem, size = 0x4, offset = 0x4, fixed_abs, tag = 'smem constant byte address 0x4 - core index']
  #allocation1 [shape = 'u32[72,128]{1,0:T(1,128)}', space=vmem, size = 0x9000, scoped, tag = 'internal scratch']
  #allocation2 [shape = 'f32[1,1]{1,0:T(1,128)S(1)}', space=vmem, size = 0x200, scoped, tag = 'scoped memory for my_model_forward.1']
  %s0 = inlined_call_operand.vmem [shape: f32[2,8,32], index: 0, kind: input, shape index: {}]
  %s1 = inlined_call_operand.vmem [shape: f32[32,96], index: 1, kind: input, shape index: {}]
  %s2 = inlined_call_operand.vmem [shape: f32[1,96], index: 2, kind: input, shape index: {}]
  %s3 = inlined_call_operand.vmem [shape: f32[32,64], index: 3, kind: input, shape index: {}]
  %s4 = inlined_call_operand.vmem [shape: f32[1,64], index: 4, kind: input, shape index: {}]
  %s5 = inlined_call_operand.vmem [shape: f32[64,32], index: 5, kind: input, shape index: {}]
  %s6 = inlined_call_operand.vmem [shape: f32[1,32], index: 6, kind: input, shape index: {}]
  %s7 = inlined_call_operand.vmem [shape: f32[32,16], index: 7, kind: input, shape index: {}]
  %s8 = inlined_call_operand.vmem [shape: f32[1,16], index: 8, kind: input, shape index: {}]
  %s9 = inlined_call_operand.vmem [shape: f32[16,1], index: 9, kind: input, shape index: {}]
  %s10 = inlined_call_operand.<no memory space> [shape: f32[1,1], index: 10, kind: input, shape index: {}]
  %s11 = inlined_call_operand.vmem [shape: f32[2,8,1], index: 11, kind: output, shape index: {}]
  %s12 = sld [smem:[#allocation0]]
  $region77: #{my_model_forward.1} parent=0
    _
  %s14 = ssub.s32 1, %s12
  %s15 = scalar_select 0, %s14, %s12
  %v16 = vstv %s10
  %17 = vst [vmem:[#allocation2] sm:$0x1] %v16
  loop: start=0, step=1, limit=4
  $region2: #{my_model_forward.1} parent=0 // loop_pre_header
    _
  $region3: #{my_model_forward.1} parent=0 // loop_header
    %s19 = sphi 0, %s23
    %p20 = scmp.ge.s32.totalorder %s19, 4
    %s29 = sphi 0, %s31
    %s32 = sphi 0, %s29
    %s33 = sphi 0, %s32
    %s49 = sphi 0, %s33
    %s53 = sphi 0, %s53
    %s55 = sphi 0, %s53
    %s56 = sphi 0, %s55
    %s70 = sphi 0, %s56
    %s74 = sphi 0, %s74
    %s76 = sphi 0, %s74
    %s77 = sphi 0, %s76
    %s91 = sphi 0, %s77
    %s95 = sphi 0, %s95
    %s97 = sphi 0, %s95
    %s98 = sphi 0, %s97
    %s112 = sphi 0, %s98
    %s116 = sphi 0, %s116
    %s118 = sphi 0, %s116
    %s119 = sphi 0, %s118
    %s133 = sphi 0, %s119
    %s137 = sphi 0, %s137
    %s139 = sphi 0, %s137
    %s140 = sphi 0, %s139
    %s154 = sphi 0, %s140
    %s158 = sphi 0, %s158
    %s160 = sphi 0, %s158
    %s161 = sphi 0, %s160
    %s175 = sphi 0, %s161
    %s179 = sphi 0, %s179
    %s181 = sphi 0, %s179
    %s182 = sphi 0, %s181
    %s196 = sphi 0, %s182
    %s200 = sphi 0, %s200
    %s202 = sphi 0, %s200
    %s203 = sphi 0, %s202
    %s217 = sphi 0, %s203
    %s221 = sphi 0, %s221
    %s223 = sphi 0, %s221
    %s224 = sphi 0, %s223
    %s238 = sphi 0, %s224
    %s242 = sphi 0, %s242
    %s244 = sphi 0, %s242
    %s245 = sphi 0, %s244
    %s259 = sphi 0, %s245
    %s265 = sphi 0, %s267
    %s268 = sphi 0, %s265
    %s269 = sphi 0, %s268
    %s285 = sphi 0, %s269
  $region4: #{my_model_forward.1} parent=0 // loop_header_branch
    %22 = sbr.rel (%p20) target = $region8
  $region5: #{my_model_forward.1} parent=0 // loop_body
    %s24 = ssub.s32 %s19, 1
    %s25 = ssub.s32 %s19, 2
    %s26 = sadd.s32 %s19, 1
    %s27 = ssub.s32 %s19, %s26
    %p28 = scmp.eq.s32.totalorder %s27, 0
    %s30 = sadd.s32 %s29, 1
    %s31 = scalar_select %p28, %s29, %s30
    %p34 = pneg %p28
    %p35 = scmp.eq.s32.totalorder %s19, 1
    %p36 = por %p34, %p35
    %p37 = scmp.ne.s32.totalorder %s29, %s32
    %p38 = scmp.eq.s32.totalorder %s19, 0
    %p39 = por %p37, %p38
    %p40 = scmp.ne.s32.totalorder %s29, %s32
    %p41 = scmp.eq.s32.totalorder %s24, 1
    %p42 = por %p40, %p41
    %p43 = scmp.ne.s32.totalorder %s32, %s33
    %p44 = scmp.eq.s32.totalorder %s24, 0
    %p45 = por %p43, %p44
    %p46 = scmp.ne.s32.totalorder %s32, %s33
    %p47 = scmp.eq.s32.totalorder %s25, 1
    %p48 = por %p46, %p47
    %p50 = scmp.ne.s32.totalorder %s33, %s49
    %p51 = scmp.eq.s32.totalorder %s25, 0
    %p52 = por %p50, %p51
    %s54 = sadd.s32 %s53, 1
    %p57 = scmp.eq.s32.totalorder %s19, 1
    %p58 = scmp.ne.s32.totalorder %s53, %s55
    %p59 = scmp.eq.s32.totalorder %s19, 0
    %p60 = por %p58, %p59
    %p61 = scmp.ne.s32.totalorder %s53, %s55
    %p62 = scmp.eq.s32.totalorder %s24, 1
    %p63 = por %p61, %p62
    %p64 = scmp.ne.s32.totalorder %s55, %s56
    %p65 = scmp.eq.s32.totalorder %s24, 0
    %p66 = por %p64, %p65
    %p67 = scmp.ne.s32.totalorder %s55, %s56
    %p68 = scmp.eq.s32.totalorder %s25, 1
    %p69 = por %p67, %p68
    %p71 = scmp.ne.s32.totalorder %s56, %s70
    %p72 = scmp.eq.s32.totalorder %s25, 0
    %p73 = por %p71, %p72
    %s75 = sadd.s32 %s74, 1
    %p78 = scmp.eq.s32.totalorder %s19, 1
    %p79 = scmp.ne.s32.totalorder %s74, %s76
    %p80 = scmp.eq.s32.totalorder %s19, 0
    %p81 = por %p79, %p80
    %p82 = scmp.ne.s32.totalorder %s74, %s76
    %p83 = scmp.eq.s32.totalorder %s24, 1
    %p84 = por %p82, %p83
    %p85 = scmp.ne.s32.totalorder %s76, %s77
    %p86 = scmp.eq.s32.totalorder %s24, 0
    %p87 = por %p85, %p86
    %p88 = scmp.ne.s32.totalorder %s76, %s77
    %p89 = scmp.eq.s32.totalorder %s25, 1
    %p90 = por %p88, %p89
    %p92 = scmp.ne.s32.totalorder %s77, %s91
    %p93 = scmp.eq.s32.totalorder %s25, 0
    %p94 = por %p92, %p93
    %s96 = sadd.s32 %s95, 1
    %p99 = scmp.eq.s32.totalorder %s19, 1
    %p100 = scmp.ne.s32.totalorder %s95, %s97
    %p101 = scmp.eq.s32.totalorder %s19, 0
    %p102 = por %p100, %p101
    %p103 = scmp.ne.s32.totalorder %s95, %s97
    %p104 = scmp.eq.s32.totalorder %s24, 1
    %p105 = por %p103, %p104
    %p106 = scmp.ne.s32.totalorder %s97, %s98
    %p107 = scmp.eq.s32.totalorder %s24, 0
    %p108 = por %p106, %p107
    %p109 = scmp.ne.s32.totalorder %s97, %s98
    %p110 = scmp.eq.s32.totalorder %s25, 1
    %p111 = por %p109, %p110
    %p113 = scmp.ne.s32.totalorder %s98, %s112
    %p114 = scmp.eq.s32.totalorder %s25, 0
    %p115 = por %p113, %p114
    %s117 = sadd.s32 %s116, 1
    %p120 = scmp.eq.s32.totalorder %s19, 1
    %p121 = scmp.ne.s32.totalorder %s116, %s118
    %p122 = scmp.eq.s32.totalorder %s19, 0
    %p123 = por %p121, %p122
    %p124 = scmp.ne.s32.totalorder %s116, %s118
    %p125 = scmp.eq.s32.totalorder %s24, 1
    %p126 = por %p124, %p125
    %p127 = scmp.ne.s32.totalorder %s118, %s119
    %p128 = scmp.eq.s32.totalorder %s24, 0
    %p129 = por %p127, %p128
    %p130 = scmp.ne.s32.totalorder %s118, %s119
    %p131 = scmp.eq.s32.totalorder %s25, 1
    %p132 = por %p130, %p131
    %p134 = scmp.ne.s32.totalorder %s119, %s133
    %p135 = scmp.eq.s32.totalorder %s25, 0
    %p136 = por %p134, %p135
    %s138 = sadd.s32 %s137, 1
    %p141 = scmp.eq.s32.totalorder %s19, 1
    %p142 = scmp.ne.s32.totalorder %s137, %s139
    %p143 = scmp.eq.s32.totalorder %s19, 0
    %p144 = por %p142, %p143
    %p145 = scmp.ne.s32.totalorder %s137, %s139
    %p146 = scmp.eq.s32.totalorder %s24, 1
    %p147 = por %p145, %p146
    %p148 = scmp.ne.s32.totalorder %s139, %s140
    %p149 = scmp.eq.s32.totalorder %s24, 0
    %p150 = por %p148, %p149
    %p151 = scmp.ne.s32.totalorder %s139, %s140
    %p152 = scmp.eq.s32.totalorder %s25, 1
    %p153 = por %p151, %p152
    %p155 = scmp.ne.s32.totalorder %s140, %s154
    %p156 = scmp.eq.s32.totalorder %s25, 0
    %p157 = por %p155, %p156
    %s159 = sadd.s32 %s158, 1
    %p162 = scmp.eq.s32.totalorder %s19, 1
    %p163 = scmp.ne.s32.totalorder %s158, %s160
    %p164 = scmp.eq.s32.totalorder %s19, 0
    %p165 = por %p163, %p164
    %p166 = scmp.ne.s32.totalorder %s158, %s160
    %p167 = scmp.eq.s32.totalorder %s24, 1
    %p168 = por %p166, %p167
    %p169 = scmp.ne.s32.totalorder %s160, %s161
    %p170 = scmp.eq.s32.totalorder %s24, 0
    %p171 = por %p169, %p170
    %p172 = scmp.ne.s32.totalorder %s160, %s161
    %p173 = scmp.eq.s32.totalorder %s25, 1
    %p174 = por %p172, %p173
    %p176 = scmp.ne.s32.totalorder %s161, %s175
    %p177 = scmp.eq.s32.totalorder %s25, 0
    %p178 = por %p176, %p177
    %s180 = sadd.s32 %s179, 1
    %p183 = scmp.eq.s32.totalorder %s19, 1
    %p184 = scmp.ne.s32.totalorder %s179, %s181
    %p185 = scmp.eq.s32.totalorder %s19, 0
    %p186 = por %p184, %p185
    %p187 = scmp.ne.s32.totalorder %s179, %s181
    %p188 = scmp.eq.s32.totalorder %s24, 1
    %p189 = por %p187, %p188
    %p190 = scmp.ne.s32.totalorder %s181, %s182
    %p191 = scmp.eq.s32.totalorder %s24, 0
    %p192 = por %p190, %p191
    %p193 = scmp.ne.s32.totalorder %s181, %s182
    %p194 = scmp.eq.s32.totalorder %s25, 1
    %p195 = por %p193, %p194
    %p197 = scmp.ne.s32.totalorder %s182, %s196
    %p198 = scmp.eq.s32.totalorder %s25, 0
    %p199 = por %p197, %p198
    %s201 = sadd.s32 %s200, 1
    %p204 = scmp.eq.s32.totalorder %s19, 1
    %p205 = scmp.ne.s32.totalorder %s200, %s202
    %p206 = scmp.eq.s32.totalorder %s19, 0
    %p207 = por %p205, %p206
    %p208 = scmp.ne.s32.totalorder %s200, %s202
    %p209 = scmp.eq.s32.totalorder %s24, 1
    %p210 = por %p208, %p209
    %p211 = scmp.ne.s32.totalorder %s202, %s203
    %p212 = scmp.eq.s32.totalorder %s24, 0
    %p213 = por %p211, %p212
    %p214 = scmp.ne.s32.totalorder %s202, %s203
    %p215 = scmp.eq.s32.totalorder %s25, 1
    %p216 = por %p214, %p215
    %p218 = scmp.ne.s32.totalorder %s203, %s217
    %p219 = scmp.eq.s32.totalorder %s25, 0
    %p220 = por %p218, %p219
    %s222 = sadd.s32 %s221, 1
    %p225 = scmp.eq.s32.totalorder %s19, 1
    %p226 = scmp.ne.s32.totalorder %s221, %s223
    %p227 = scmp.eq.s32.totalorder %s19, 0
    %p228 = por %p226, %p227
    %p229 = scmp.ne.s32.totalorder %s221, %s223
    %p230 = scmp.eq.s32.totalorder %s24, 1
    %p231 = por %p229, %p230
    %p232 = scmp.ne.s32.totalorder %s223, %s224
    %p233 = scmp.eq.s32.totalorder %s24, 0
    %p234 = por %p232, %p233
    %p235 = scmp.ne.s32.totalorder %s223, %s224
    %p236 = scmp.eq.s32.totalorder %s25, 1
    %p237 = por %p235, %p236
    %p239 = scmp.ne.s32.totalorder %s224, %s238
    %p240 = scmp.eq.s32.totalorder %s25, 0
    %p241 = por %p239, %p240
    %s243 = sadd.s32 %s242, 1
    %p246 = scmp.eq.s32.totalorder %s19, 1
    %p247 = scmp.ne.s32.totalorder %s242, %s244
    %p248 = scmp.eq.s32.totalorder %s19, 0
    %p249 = por %p247, %p248
    %p250 = scmp.ne.s32.totalorder %s242, %s244
    %p251 = scmp.eq.s32.totalorder %s24, 1
    %p252 = por %p250, %p251
    %p253 = scmp.ne.s32.totalorder %s244, %s245
    %p254 = scmp.eq.s32.totalorder %s24, 0
    %p255 = por %p253, %p254
    %p256 = scmp.ne.s32.totalorder %s244, %s245
    %p257 = scmp.eq.s32.totalorder %s25, 1
    %p258 = por %p256, %p257
    %p260 = scmp.ne.s32.totalorder %s245, %s259
    %p261 = scmp.eq.s32.totalorder %s25, 0
    %p262 = por %p260, %p261
    %s263 = ssub.s32 %s19, %s26
    %p264 = scmp.eq.s32.totalorder %s263, 0
    %s266 = sadd.s32 %s265, 1
    %s267 = scalar_select %p264, %s265, %s266
    %p270 = pneg %p264
    %p271 = scmp.eq.s32.totalorder %s19, 1
    %p272 = por %p270, %p271
    %p273 = scmp.ne.s32.totalorder %s265, %s268
    %p274 = scmp.eq.s32.totalorder %s19, 0
    %p275 = por %p273, %p274
    %p276 = scmp.ne.s32.totalorder %s265, %s268
    %p277 = scmp.eq.s32.totalorder %s24, 1
    %p278 = por %p276, %p277
    %p279 = scmp.ne.s32.totalorder %s268, %s269
    %p280 = scmp.eq.s32.totalorder %s24, 0
    %p281 = por %p279, %p280
    %p282 = scmp.ne.s32.totalorder %s268, %s269
    %p283 = scmp.eq.s32.totalorder %s25, 1
    %p284 = por %p282, %p283
    %p286 = scmp.ne.s32.totalorder %s269, %s285
    %p287 = scmp.eq.s32.totalorder %s25, 0
    %p288 = por %p286, %p287
    %p289 = scmp.le.s32.totalorder 1, %s19
    %p290 = scmp.lt.s32.totalorder %s19, 3
    %p291 = pnand %p289, %p290
    %p292 = pneg %p291
    // Predicated region
    $region9: #{my_model_forward.1} parent=5 // pred_check
      _
    $region10: #{my_model_forward.1} parent=5 // pred_check_branch
      %294 = sbr.rel (%p291) target = $region12
    $region11: #{my_model_forward.1} parent=5 // pred_region
      %s295 = ssub.s32 %s19, 1
      // Predicated region
      $region13: #{my_model_forward.1} parent=11 // pred_check
        %p296 = pneg %p66
      $region14: #{my_model_forward.1} parent=11 // pred_check_branch
        %298 = sbr.rel (%p296) target = $region16
      $region15: #{my_model_forward.1} parent=11 // pred_region
        _
      $region16: #{my_model_forward.1} parent=11 // pred_fallthru
        _
      // Predicated region
      $region17: #{my_model_forward.1} parent=11 // pred_check
        %p299 = pneg %p87
      $region18: #{my_model_forward.1} parent=11 // pred_check_branch
        %301 = sbr.rel (%p299) target = $region20
      $region19: #{my_model_forward.1} parent=11 // pred_region
        _
      $region20: #{my_model_forward.1} parent=11 // pred_fallthru
        _
      // Predicated region
      $region21: #{my_model_forward.1} parent=11 // pred_check
        %p302 = pneg %p108
      $region22: #{my_model_forward.1} parent=11 // pred_check_branch
        %304 = sbr.rel (%p302) target = $region24
      $region23: #{my_model_forward.1} parent=11 // pred_region
        _
      $region24: #{my_model_forward.1} parent=11 // pred_fallthru
        _
      // Predicated region
      $region25: #{my_model_forward.1} parent=11 // pred_check
        %p305 = pneg %p129
      $region26: #{my_model_forward.1} parent=11 // pred_check_branch
        %307 = sbr.rel (%p305) target = $region28
      $region27: #{my_model_forward.1} parent=11 // pred_region
        _
      $region28: #{my_model_forward.1} parent=11 // pred_fallthru
        _
      // Predicated region
      $region29: #{my_model_forward.1} parent=11 // pred_check
        %p308 = pneg %p150
      $region30: #{my_model_forward.1} parent=11 // pred_check_branch
        %310 = sbr.rel (%p308) target = $region32
      $region31: #{my_model_forward.1} parent=11 // pred_region
        _
      $region32: #{my_model_forward.1} parent=11 // pred_fallthru
        _
      // Predicated region
      $region33: #{my_model_forward.1} parent=11 // pred_check
        %p311 = pneg %p171
      $region34: #{my_model_forward.1} parent=11 // pred_check_branch
        %313 = sbr.rel (%p311) target = $region36
      $region35: #{my_model_forward.1} parent=11 // pred_region
        _
      $region36: #{my_model_forward.1} parent=11 // pred_fallthru
        _
      // Predicated region
      $region37: #{my_model_forward.1} parent=11 // pred_check
        %p314 = pneg %p192
      $region38: #{my_model_forward.1} parent=11 // pred_check_branch
        %316 = sbr.rel (%p314) target = $region40
      $region39: #{my_model_forward.1} parent=11 // pred_region
        _
      $region40: #{my_model_forward.1} parent=11 // pred_fallthru
        _
      // Predicated region
      $region41: #{my_model_forward.1} parent=11 // pred_check
        %p317 = pneg %p213
      $region42: #{my_model_forward.1} parent=11 // pred_check_branch
        %319 = sbr.rel (%p317) target = $region44
      $region43: #{my_model_forward.1} parent=11 // pred_region
        _
      $region44: #{my_model_forward.1} parent=11 // pred_fallthru
        _
      // Predicated region
      $region45: #{my_model_forward.1} parent=11 // pred_check
        %p320 = pneg %p234
      $region46: #{my_model_forward.1} parent=11 // pred_check_branch
        %322 = sbr.rel (%p320) target = $region48
      $region47: #{my_model_forward.1} parent=11 // pred_region
        _
      $region48: #{my_model_forward.1} parent=11 // pred_fallthru
        _
      // Predicated region
      $region49: #{my_model_forward.1} parent=11 // pred_check
        %p323 = pneg %p255
      $region50: #{my_model_forward.1} parent=11 // pred_check_branch
        %325 = sbr.rel (%p323) target = $region52
      $region51: #{my_model_forward.1} parent=11 // pred_region
        _
      $region52: #{my_model_forward.1} parent=11 // pred_fallthru
        _
    $region12: #{my_model_forward.1} parent=5 // pred_fallthru
      _
    %p326 = scmp.lt.s32.totalorder %s19, 2
    // Predicated region
    $region53: #{my_model_forward.1} parent=5 // pred_check
      %p327 = pneg %p326
    $region54: #{my_model_forward.1} parent=5 // pred_check_branch
      %329 = sbr.rel (%p327) target = $region56
    $region55: #{my_model_forward.1} parent=5 // pred_region
      // Predicated region
      $region57: #{my_model_forward.1} parent=55 // pred_check
        %p330 = pneg %p39
      $region58: #{my_model_forward.1} parent=55 // pred_check_branch
        %332 = sbr.rel (%p330) target = $region60
      $region59: #{my_model_forward.1} parent=55 // pred_region
        %p333 = scmp.lt.s32.totalorder %s19, 1
        %s334 = scalar_select %p333, %s19, 1
        %s335 = smul.addr %s334, 8
        %s336 = scalar_lea.vmem %s0, %s335
      $region60: #{my_model_forward.1} parent=55 // pred_fallthru
        _
    $region56: #{my_model_forward.1} parent=5 // pred_fallthru
      _
    %p337 = scmp.le.s32.totalorder 1, %s19
    %p338 = scmp.lt.s32.totalorder %s19, 3
    %p339 = pnand %p337, %p338
    %p340 = pneg %p339
    // Predicated region
    $region61: #{my_model_forward.1} parent=5 // pred_check
      _
    $region62: #{my_model_forward.1} parent=5 // pred_check_branch
      %342 = sbr.rel (%p339) target = $region64
    $region63: #{my_model_forward.1} parent=5 // pred_region
      %s343 = ssub.s32 %s19, 1
      %p344 = scmp.lt.s32.totalorder %s24, 1
      %s345 = scalar_select %p344, %s24, 1
      %s346 = smul.addr %s345, 8
      %s347 = scalar_lea.vmem %s0, %s346
      %p348 = pneg %p45
      %p349 = pneg %p42
      %p350 = pneg %p66
      %p351 = pneg %p63
      %p352 = pneg %p87
      %p353 = pneg %p84
      %p354 = pneg %p108
      %p355 = pneg %p105
      %p356 = pneg %p129
      %p357 = pneg %p126
      %p358 = pneg %p150
      %p359 = pneg %p147
      %p360 = pneg %p171
      %p361 = pneg %p168
      %p362 = pneg %p192
      %p363 = pneg %p189
      %p364 = pneg %p213
      %p365 = pneg %p210
      %p366 = pneg %p234
      %p367 = pneg %p231
      %p368 = pneg %p255
      %p369 = pneg %p252
      %p370 = pneg %p281
      %p371 = pneg %p278
      %p372 = scmp.lt.s32.totalorder %s24, 1
      %s373 = scalar_select %p372, %s24, 1
      %s374 = smul.addr %s373, 8
      %s375 = scalar_lea.vmem %s11, %s374
      %p376 = scmp.lt.s32.totalorder %s24, 1
      %s377 = scalar_select %p376, %s24, 1
      %s378 = smul.addr %s377, 8
      %s379 = scalar_lea.vmem %s0, %s378
      %p380 = scmp.lt.s32.totalorder %s24, 1
      %s381 = scalar_select %p380, %s24, 1
      %s382 = smul.addr %s381, 8
      %s383 = scalar_lea.vmem %s11, %s382
      %v384 = vld [vmem:[%s379] sm:$0xff]
      %v385 = vld [vmem:[%s1] sm:$0xff]
      %v386 = vld [vmem:[%s1 + $0x8] sm:$0xff]
      %v387 = vld [vmem:[%s1 + $0x10] sm:$0xff]
      %v388 = vld [vmem:[%s1 + $0x18] sm:$0xff]
      %v389 = vld [vmem:[%s2] sm:$0x1]
      %v391 = vperm.slane %v389, 0
      %vm393 = vcmask 261120
      %v395 = vsel %vm393, %v384, 0
      %397 = vmatpush.msra.mxu0 0.0
      %398 = vmatpush.msra.mxu0 0.0
      %399 = vmatpush.msra.mxu0 0.0
      %400 = vmatpush.msra.mxu0 0.0
      %401 = vmatpush.msra.mxu0 0.0
      %402 = vmatpush.msra.mxu0 0.0
      %403 = vmatpush.msra.mxu0 0.0
      %404 = vmatpush.msra.mxu0 0.0
      %405 = vmatpush.msra.mxu0 0.0
      %406 = vmatpush.msra.mxu0 0.0
      %407 = vmatpush.msra.mxu0 0.0
      %408 = vmatpush.msra.mxu0 0.0
      %409 = vmatpush.msra.mxu0 %v388
      %410 = vmatpush.msra.mxu0 %v387
      %411 = vmatpush.msra.mxu0 %v386
      %412 = vmatpush.msra.mxu0 %v385
      %413 = vmatmul.f32.gmra.mxu0 %v395
      %v414 = vpop.f32.mrf.mxu0
      %v415 = vadd.f32 %v391, %v414
      %416 = vdwg.mxu0
      %418 = vrot.lane.b32.xlu0 %v415, 96
      %v419 = vpop.permute.xlu0 %418
      %v420 = vsel %vm393, %v415, 0
      %v422 = vsel %vm393, %v419, 0
      %424 = vmatpush.xpose.msra.mxu0 0.0
      %425 = vmatpush.xpose.msra.mxu0 0.0
      %426 = vmatpush.xpose.msra.mxu0 0.0
      %427 = vmatpush.xpose.msra.mxu0 0.0
      %428 = vmatpush.xpose.msra.mxu0 0.0
      %429 = vmatpush.xpose.msra.mxu0 0.0
      %430 = vmatpush.xpose.msra.mxu0 0.0
      %431 = vmatpush.xpose.msra.mxu0 0.0
      %432 = vmatpush.xpose.msra.mxu0 0.0
      %433 = vmatpush.xpose.msra.mxu0 0.0
      %434 = vmatpush.xpose.msra.mxu0 0.0
      %435 = vmatpush.xpose.msra.mxu0 0.0
      %436 = vmatpush.xpose.msra.mxu0 0.0
      %437 = vmatpush.xpose.msra.mxu0 0.0
      %438 = vmatpush.xpose.msra.mxu0 0.0
      %439 = vmatpush.xpose.msra.mxu0 %v422
      %440 = vmatmul.f32.gmra.mxu0 %v420
      %v441 = vpop.f32.mrf.mxu0
      %v442 = vadd.f32 0.0, %v441
      %443 = vdwg.mxu0
      %vm444 = vcmask 64512
      %v445 = vsel %vm444, %v442, -inf
      %446 = vmax.xlane.f32.xlu0 %v445
      %v447 = vpop.xlane.xlu0 %446
      %v448 = vsub.f32 %v442, %v447
      %v449 = vmul.f32 %v448, 1.442695
      %v450 = vpow.pop %v449
      %v451 = vsel %vm444, %v450, 0.0
      %452 = vadd.xlane.f32.xlu0 %v451
      %v453 = vpop.xlane.xlu0 %452
      %v454 = vrcp.pop %v453
      %v455 = vmul.f32 %v450, %v454
      %456 = vrot.lane.b32.xlu0 %v415, 64
      %v457 = vpop.permute.xlu0 %456
      %v460 = vsel %vm444, %v455, 0
      %462 = vmatpush.msra.mxu0 0.0
      %463 = vmatpush.msra.mxu0 0.0
      %464 = vmatpush.msra.mxu0 0.0
      %465 = vmatpush.msra.mxu0 0.0
      %466 = vmatpush.msra.mxu0 0.0
      %467 = vmatpush.msra.mxu0 0.0
      %468 = vmatpush.msra.mxu0 0.0
      %469 = vmatpush.msra.mxu0 0.0
      %470 = vmatpush.msra.mxu0 0.0
      %471 = vmatpush.msra.mxu0 0.0
      %472 = vmatpush.msra.mxu0 0.0
      %473 = vmatpush.msra.mxu0 0.0
      %474 = vmatpush.msra.mxu0 0.0
      %475 = vmatpush.msra.mxu0 0.0
      %476 = vmatpush.msra.mxu0 0.0
      %477 = vmatpush.msra.mxu0 %v457
      %478 = vmatmul.f32.gmra.mxu0 %v460
      %v479 = vpop.f32.mrf.mxu0
      %v480 = vadd.f32 0.0, %v479
      %481 = vdwg.mxu0
      %v482 = vld [vmem:[%s3] sm:$0xff]
      %v483 = vld [vmem:[%s3 + $0x8] sm:$0xff]
      %v484 = vld [vmem:[%s3 + $0x10] sm:$0xff]
      %v485 = vld [vmem:[%s3 + $0x18] sm:$0xff]
      %v486 = vld [vmem:[%s4] sm:$0x1]
      %v488 = vperm.slane %v486, 0
      %v491 = vsel %vm393, %v480, 0
      %493 = vmatpush.msra.mxu0 0.0
      %494 = vmatpush.msra.mxu0 0.0
      %495 = vmatpush.msra.mxu0 0.0
      %496 = vmatpush.msra.mxu0 0.0
      %497 = vmatpush.msra.mxu0 0.0
      %498 = vmatpush.msra.mxu0 0.0
      %499 = vmatpush.msra.mxu0 0.0
      %500 = vmatpush.msra.mxu0 0.0
      %501 = vmatpush.msra.mxu0 0.0
      %502 = vmatpush.msra.mxu0 0.0
      %503 = vmatpush.msra.mxu0 0.0
      %504 = vmatpush.msra.mxu0 0.0
      %505 = vmatpush.msra.mxu0 %v485
      %506 = vmatpush.msra.mxu0 %v484
      %507 = vmatpush.msra.mxu0 %v483
      %508 = vmatpush.msra.mxu0 %v482
      %509 = vmatmul.f32.gmra.mxu0 %v491
      %v510 = vpop.f32.mrf.mxu0
      %v511 = vadd.f32 %v488, %v510
      %512 = vdwg.mxu0
      %v513 = vmax.f32 %v511, 0.0
      %v514 = vld [vmem:[%s5] sm:$0xff]
      %v515 = vld [vmem:[%s5 + $0x8] sm:$0xff]
      %v516 = vld [vmem:[%s5 + $0x10] sm:$0xff]
      %v517 = vld [vmem:[%s5 + $0x18] sm:$0xff]
      %v518 = vld [vmem:[%s5 + $0x20] sm:$0xff]
      %v519 = vld [vmem:[%s5 + $0x28] sm:$0xff]
      %v520 = vld [vmem:[%s5 + $0x30] sm:$0xff]
      %v521 = vld [vmem:[%s5 + $0x38] sm:$0xff]
      %v522 = vld [vmem:[%s6] sm:$0x1]
      %v524 = vperm.slane %v522, 0
      %vm526 = vcmask 523264
      %v528 = vsel %vm526, %v513, 0
      %530 = vmatpush.msra.mxu0 0.0
      %531 = vmatpush.msra.mxu0 0.0
      %532 = vmatpush.msra.mxu0 0.0
      %533 = vmatpush.msra.mxu0 0.0
      %534 = vmatpush.msra.mxu0 0.0
      %535 = vmatpush.msra.mxu0 0.0
      %536 = vmatpush.msra.mxu0 0.0
      %537 = vmatpush.msra.mxu0 0.0
      %538 = vmatpush.msra.mxu0 %v521
      %539 = vmatpush.msra.mxu0 %v520
      %540 = vmatpush.msra.mxu0 %v519
      %541 = vmatpush.msra.mxu0 %v518
      %542 = vmatpush.msra.mxu0 %v517
      %543 = vmatpush.msra.mxu0 %v516
      %544 = vmatpush.msra.mxu0 %v515
      %545 = vmatpush.msra.mxu0 %v514
      %546 = vmatmul.f32.gmra.mxu0 %v528
      %v547 = vpop.f32.mrf.mxu0
      %v548 = vadd.f32 %v524, %v547
      %549 = vdwg.mxu0
      %v550 = vmax.f32 %v548, 0.0
      %v551 = vld [vmem:[%s7] sm:$0xff]
      %v552 = vld [vmem:[%s7 + $0x8] sm:$0xff]
      %v553 = vld [vmem:[%s7 + $0x10] sm:$0xff]
      %v554 = vld [vmem:[%s7 + $0x18] sm:$0xff]
      %v555 = vld [vmem:[%s8] sm:$0x1]
      %v557 = vperm.slane %v555, 0
      %v560 = vsel %vm393, %v550, 0
      %562 = vmatpush.msra.mxu0 0.0
      %563 = vmatpush.msra.mxu0 0.0
      %564 = vmatpush.msra.mxu0 0.0
      %565 = vmatpush.msra.mxu0 0.0
      %566 = vmatpush.msra.mxu0 0.0
      %567 = vmatpush.msra.mxu0 0.0
      %568 = vmatpush.msra.mxu0 0.0
      %569 = vmatpush.msra.mxu0 0.0
      %570 = vmatpush.msra.mxu0 0.0
      %571 = vmatpush.msra.mxu0 0.0
      %572 = vmatpush.msra.mxu0 0.0
      %573 = vmatpush.msra.mxu0 0.0
      %574 = vmatpush.msra.mxu0 %v554
      %575 = vmatpush.msra.mxu0 %v553
      %576 = vmatpush.msra.mxu0 %v552
      %577 = vmatpush.msra.mxu0 %v551
      %578 = vmatmul.f32.gmra.mxu0 %v560
      %v579 = vpop.f32.mrf.mxu0
      %v580 = vadd.f32 %v557, %v579
      %581 = vdwg.mxu0
      %v582 = vmax.f32 %v580, 0.0
      %v583 = vld [vmem:[%s9] sm:$0xff]
      %v584 = vld [vmem:[%s9 + $0x8] sm:$0xff]
      %v585 = vld [vmem:[#allocation2] sm:$0x1]
      %v587 = vperm.slane %v585, 0
      %vm589 = vcmask 130048
      %v591 = vsel %vm589, %v582, 0
      %593 = vmatpush.msra.mxu0 0.0
      %594 = vmatpush.msra.mxu0 0.0
      %595 = vmatpush.msra.mxu0 0.0
      %596 = vmatpush.msra.mxu0 0.0
      %597 = vmatpush.msra.mxu0 0.0
      %598 = vmatpush.msra.mxu0 0.0
      %599 = vmatpush.msra.mxu0 0.0
      %600 = vmatpush.msra.mxu0 0.0
      %601 = vmatpush.msra.mxu0 0.0
      %602 = vmatpush.msra.mxu0 0.0
      %603 = vmatpush.msra.mxu0 0.0
      %604 = vmatpush.msra.mxu0 0.0
      %605 = vmatpush.msra.mxu0 0.0
      %606 = vmatpush.msra.mxu0 0.0
      %607 = vmatpush.msra.mxu0 %v584
      %608 = vmatpush.msra.mxu0 %v583
      %609 = vmatmul.f32.gmra.mxu0 %v591
      %v610 = vpop.f32.mrf.mxu0
      %v611 = vadd.f32 %v587, %v610
      %612 = vdwg.mxu0
      %vm613 = vcmask 7168
      %614 = vst.msk [vmem:[%s383] sm:$0xff] %vm613, %v611
      %p615 = scmp.lt.s32.totalorder %s24, 1
      %s616 = scalar_select %p615, %s24, 1
      %s617 = smul.addr %s616, 8
      %s618 = scalar_lea.vmem %s11, %s617
      // Predicated region
      $region65: #{my_model_forward.1} parent=63 // pred_check
        %p619 = pneg %p278
      $region66: #{my_model_forward.1} parent=63 // pred_check_branch
        %621 = sbr.rel (%p619) target = $region68
      $region67: #{my_model_forward.1} parent=63 // pred_region
        _
      $region68: #{my_model_forward.1} parent=63 // pred_fallthru
        _
    $region64: #{my_model_forward.1} parent=5 // pred_fallthru
      _
    %p622 = scmp.le.s32.totalorder 2, %s19
    // Predicated region
    $region69: #{my_model_forward.1} parent=5 // pred_check
      %p623 = pneg %p622
    $region70: #{my_model_forward.1} parent=5 // pred_check_branch
      %625 = sbr.rel (%p623) target = $region72
    $region71: #{my_model_forward.1} parent=5 // pred_region
      %s626 = ssub.s32 %s19, 2
      // Predicated region
      $region73: #{my_model_forward.1} parent=71 // pred_check
        %p627 = pneg %p284
      $region74: #{my_model_forward.1} parent=71 // pred_check_branch
        %629 = sbr.rel (%p627) target = $region76
      $region75: #{my_model_forward.1} parent=71 // pred_region
        %p630 = scmp.lt.s32.totalorder %s25, 1
        %s631 = scalar_select %p630, %s25, 1
        %s632 = smul.addr %s631, 8
        %s633 = scalar_lea.vmem %s11, %s632
      $region76: #{my_model_forward.1} parent=71 // pred_fallthru
        _
    $region72: #{my_model_forward.1} parent=5 // pred_fallthru
      _
  $region6: #{my_model_forward.1} parent=0 // loop_footer
    %s23 = sadd.s32 1, %s19
  $region7: #{my_model_forward.1} parent=0 // loop_footer_branch
    %18 = sbr.rel target = $region3
  $region8: #{my_model_forward.1} parent=0 // loop_exit
    _

</llo_original>
